<compile_context>
chip_gen: v7x
topology: tpu7x:2x2x1
jax: 0.10.0
libtpu: 0.0.40
codegen_flags: <defaults>
</compile_context>

<pallas_src>
import jax
import jax.numpy as jnp
from jax.experimental import pallas as pl
from jax.experimental.pallas import tpu as pltpu


def _round_up(x, m):
    return ((x + m - 1) // m) * m


def _sine_first_kernel(x_ref, w_ref, b_ref, o_ref):
    # MXU matmul with f32 accumulation; omega_0 is already folded into w/b.
    z = jnp.dot(x_ref[...], w_ref[...], preferred_element_type=jnp.float32)
    z = z + b_ref[...]                      # (1, Fout) broadcasts over rows
    o_ref[...] = jnp.sin(z).astype(o_ref.dtype)


def sine_first(x, w, b, omega_0=30.0, *, block_rows=2048, out_dtype=None):
    """x: (B, Fin), w: (Fin, Fout), b: (Fout,) -> (B, Fout).

    Computes sin(omega_0 * (x @ w + b)) with a batch-tiled Pallas kernel.
    """
    B, Fin = x.shape
    Fin_w, Fout = w.shape
    assert Fin_w == Fin
    out_dtype = x.dtype if out_dtype is None else out_dtype

    # --- Fold omega_0 into the parameters (done once per call on tiny arrays;
    #     in a real SIREN this would happen once at init time). ---------------
    omega = jnp.float32(omega_0)
    w_s = (omega * w.astype(jnp.float32)).astype(jnp.float32)
    b_s = (omega * b.astype(jnp.float32)).astype(jnp.float32)

    # --- Lane-dense output: pad Fout to a multiple of 128 (unmasked vst). ----
    Fout_p = _round_up(Fout, 128)
    if Fout_p != Fout:
        w_s = jnp.pad(w_s, ((0, 0), (0, Fout_p - Fout)))
        b_s = jnp.pad(b_s, ((0, Fout_p - Fout),))
    b2d = b_s.reshape(1, Fout_p)

    # --- Batch tiling: large TM amortizes the ~0.35us/step grid overhead. ----
    TM = min(block_rows, _round_up(B, 8))
    TM = _round_up(TM, 8)
    B_p = _round_up(B, TM)
    if B_p != B:
        x = jnp.pad(x, ((0, B_p - B), (0, 0)))
    num_blocks = B_p // TM

    cost = pl.CostEstimate(
        flops=2 * B * Fin * Fout,
        transcendentals=B * Fout,
        bytes_accessed=4 * (B * Fin + Fin * Fout + B * Fout),
    )

    out = pl.pallas_call(
        _sine_first_kernel,
        out_shape=jax.ShapeDtypeStruct((B_p, Fout_p), out_dtype),
        grid_spec=pltpu.PrefetchScalarGridSpec(
            num_scalar_prefetch=0,
            grid=(num_blocks,),
            in_specs=[
                # x streams in TM-row tiles along the batch grid.
                pl.BlockSpec((TM, Fin), lambda i: (i, 0)),
                # W and b: constant block index -> loaded once, VMEM-resident.
                pl.BlockSpec((Fin, Fout_p), lambda i: (0, 0)),
                pl.BlockSpec((1, Fout_p), lambda i: (0, 0)),
            ],
            out_specs=pl.BlockSpec((TM, Fout_p), lambda i: (i, 0)),
        ),
        compiler_params=pltpu.CompilerParams(
            dimension_semantics=("parallel",),
        ),
        cost_estimate=cost,
    )(x, w_s, b2d)

    # Strip batch / lane padding outside the kernel.
    return out[:B, :Fout]


def sine_first_ref(x, w, b, omega_0=30.0):
    return jnp.sin(omega_0 * (x @ w + b[None, :]))


if __name__ == "__main__":
    # SIREN first layer: coordinates (in_features) -> hidden features.
    batch = 8
    in_features = 16
    out_features = 32
    omega_0 = 30.0

    key = jax.random.PRNGKey(0)
    kx, kw, kb = jax.random.split(key, 3)

    x = jax.random.normal(kx, (batch, in_features), dtype=jnp.float32)

    # nn.Linear default init: U(-1/sqrt(Fin), 1/sqrt(Fin)).
    bound = 1.0 / jnp.sqrt(jnp.float32(in_features))
    w = jax.random.uniform(kw, (in_features, out_features),
                           minval=-bound, maxval=bound, dtype=jnp.float32)
    b = jax.random.uniform(kb, (out_features,),
                           minval=-bound, maxval=bound, dtype=jnp.float32)

    y = sine_first(x, w, b, omega_0)
    y = jax.block_until_ready(y)

    y_ref = sine_first_ref(x, w, b, omega_0)
    assert y.shape == (batch, out_features)
    # omega_0 folding reorders one f32 multiply; allow a couple of ULPs of the
    # (|arg| up to ~60) sine argument.
    assert jnp.allclose(y, y_ref, atol=1e-4, rtol=1e-5)

    print("KERNEL_OK")
</pallas_src>

<mosaic_0001>
module attributes {stable_mosaic.version = 11 : i64} {
  func.func @_sine_first_kernel(%arg0: i32, %arg1: memref<8x16xf32, #tpu.memory_space<vmem>>, %arg2: memref<16x128xf32, #tpu.memory_space<vmem>>, %arg3: memref<1x128xf32, #tpu.memory_space<vmem>>, %arg4: memref<8x128xf32, #tpu.memory_space<vmem>>) attributes {dimension_semantics = [#tpu.dimension_semantics<parallel>], iteration_bounds = array<i64: 1>, scalar_prefetch = 0 : i64, scratch_operands = 0 : i64, tpu.core_type = #tpu.core_type<tc>, window_params = [{transform_indices = @transform_0, window_bounds = array<i64: 8, 16>}, {pipeline_mode = #tpu.pipeline_mode<synchronous>, transform_indices = @transform_1, window_bounds = array<i64: 16, 128>}, {pipeline_mode = #tpu.pipeline_mode<synchronous>, transform_indices = @transform_2, window_bounds = array<i64: 1, 128>}, {transform_indices = @transform_3, window_bounds = array<i64: 8, 128>}]} {
    %c0 = arith.constant 0 : index
    %c0_0 = arith.constant 0 : index
    %0 = vector.load %arg1[%c0, %c0_0] : memref<8x16xf32, #tpu.memory_space<vmem>>, vector<8x16xf32>
    %c0_1 = arith.constant 0 : index
    %c0_2 = arith.constant 0 : index
    %1 = vector.load %arg2[%c0_1, %c0_2] : memref<16x128xf32, #tpu.memory_space<vmem>>, vector<16x128xf32>
    %cst = arith.constant dense<0.000000e+00> : vector<8x128xf32>
    %2 = tpu.matmul %0, %1, %cst {dimension_numbers = #tpu.dot_dimension_numbers<[1], [0], [0], [1], [0, 0, 1, 1], [], []>} : vector<8x16xf32>, vector<16x128xf32>, vector<8x128xf32> -> vector<8x128xf32>
    %c0_3 = arith.constant 0 : index
    %c0_4 = arith.constant 0 : index
    %3 = vector.load %arg3[%c0_3, %c0_4] : memref<1x128xf32, #tpu.memory_space<vmem>>, vector<1x128xf32>
    %4 = vector.broadcast %3 : vector<1x128xf32> to vector<8x128xf32>
    %5 = arith.addf %2, %4 : vector<8x128xf32>
    %6 = math.sin %5 : vector<8x128xf32>
    %c0_5 = arith.constant 0 : index
    %c0_6 = arith.constant 0 : index
    %7 = vector.load %arg4[%c0_5, %c0_6] : memref<8x128xf32, #tpu.memory_space<vmem>>, vector<8x128xf32>
    tpu.vector_store %arg4[%c0_5, %c0_6], %6 {strides = array<i32>} : memref<8x128xf32, #tpu.memory_space<vmem>>, vector<8x128xf32>,
    return
  }
  func.func @transform_0(%arg0: i32) -> (i32, i32) {
    %c0_i32 = arith.constant 0 : i32
    %c0_i32_0 = arith.constant 0 : i32
    return %arg0, %c0_i32 : i32, i32
  }
  func.func @transform_1(%arg0: i32) -> (i32, i32) {
    %c0_i32 = arith.constant 0 : i32
    %c0_i32_0 = arith.constant 0 : i32
    %c0_i32_1 = arith.constant 0 : i32
    return %c0_i32, %c0_i32_0 : i32, i32
  }
  func.func @transform_2(%arg0: i32) -> (i32, i32) {
    %c0_i32 = arith.constant 0 : i32
    %c0_i32_0 = arith.constant 0 : i32
    %c0_i32_1 = arith.constant 0 : i32
    return %c0_i32, %c0_i32_0 : i32, i32
  }
  func.func @transform_3(%arg0: i32) -> (i32, i32) {
    %c0_i32 = arith.constant 0 : i32
    %c0_i32_0 = arith.constant 0 : i32
    return %arg0, %c0_i32 : i32, i32
  }
}

</mosaic_0001>

<llo_original>
// kernel: tpu_custom_call.1
$region0: #{tpu_custom_call.1}
  #allocation0 [shape = 'u32[]', space=smem, size = 0x4, offset = 0x4, fixed_abs, tag = 'smem constant byte address 0x4 - core index']
  #allocation1 [shape = 'u32[144,128]{1,0:T(1,128)}', space=vmem, size = 0x12000, scoped, tag = 'internal scratch']
  %s0 = inlined_call_operand.hbm [shape: f32[8,16], index: 0, kind: input, shape index: {}]
  %s1 = inlined_call_operand.hbm [shape: f32[16,128], index: 1, kind: input, shape index: {}]
  %s2 = inlined_call_operand.vmem [shape: f32[1,128], index: 2, kind: input, shape index: {}]
  %s3 = inlined_call_operand.hbm [shape: f32[8,128], index: 3, kind: output, shape index: {}]
  %s4 = sld [smem:[#allocation0]]
  $region30: #{tpu_custom_call.1} parent=0
    _
  %s6 = ssub.s32 1, %s4
  %s7 = scalar_select 0, %s6, %s4
  $region1: #{tpu_custom_call.1} parent=0
    #allocation2 [shape = 'u8[4096]{0}', space=vmem, size = 0x1000, scoped, tag = 'input window, operand 0, single buffered']
    #allocation3 [shape = 's32[1]{0}', space=sflag, size = 0x4, scoped, tag = 'scoped memory for tpu_custom_call.1']
    #allocation4 [shape = 's32[1]{0}', space=sflag, size = 0x4, scoped, tag = 'scoped memory for tpu_custom_call.1']
    #allocation5 [shape = 'u8[8192]{0}', space=vmem, size = 0x2000, scoped, tag = 'input window, operand 1, single buffered']
    #allocation6 [shape = 's32[1]{0}', space=sflag, size = 0x4, scoped, tag = 'scoped memory for tpu_custom_call.1']
    #allocation7 [shape = 'u8[4096]{0}', space=vmem, size = 0x1000, scoped, tag = 'output window, operand 0, single buffered']
    %8 = vsyncpa [#allocation3], 0
    %9 = vsyncpa [#allocation6], 0
    %10 = vsyncpa [#allocation4], 0
    // Predicated region
    $region2: #{tpu_custom_call.1} parent=1 // pred_check
      _
    $region3: #{tpu_custom_call.1} parent=1 // pred_check_branch
      %12 = sbr.rel (0) target = $region5
    $region4: #{tpu_custom_call.1} parent=1 // pred_region
      %s14 = ssub.s32 128, 128
      %15 = vsyncadd [#allocation3], %s14
      %s17 = sshll.u32 [#allocation2], 4
      %s18 = int_to_ptr.vmem [resolvable:$true] %s17
      %20 = dma.hbm_to_vmem [thread:$0]  %s0, 128, %s18, [#allocation3]
    $region5: #{tpu_custom_call.1} parent=1 // pred_fallthru
      _
    // Predicated region
    $region6: #{tpu_custom_call.1} parent=1 // pred_check
      _
    $region7: #{tpu_custom_call.1} parent=1 // pred_check_branch
      %22 = sbr.rel (0) target = $region9
    $region8: #{tpu_custom_call.1} parent=1 // pred_region
      %s24 = ssub.s32 256, 256
      %25 = vsyncadd [#allocation6], %s24
      %s26 = sshll.u32 [#allocation5], 4
      %s27 = int_to_ptr.vmem [resolvable:$true] %s26
      %32 = dma.hbm_to_vmem [thread:$0]  %s1, 256, %s27, [#allocation6], 128, 128, 8
    $region9: #{tpu_custom_call.1} parent=1 // pred_fallthru
      _
    // Predicated region
    $region10: #{tpu_custom_call.1} parent=1 // pred_check
      _
    $region11: #{tpu_custom_call.1} parent=1 // pred_check_branch
      %34 = sbr.rel (0) target = $region13
    $region12: #{tpu_custom_call.1} parent=1 // pred_region
      _
    $region13: #{tpu_custom_call.1} parent=1 // pred_fallthru
      _
    // Predicated region
    $region14: #{tpu_custom_call.1} parent=1 // pred_check
      _
    $region15: #{tpu_custom_call.1} parent=1 // pred_check_branch
      %36 = sbr.rel (0) target = $region17
    $region16: #{tpu_custom_call.1} parent=1 // pred_region
      %37 = dma.done [#allocation3], 128
    $region17: #{tpu_custom_call.1} parent=1 // pred_fallthru
      _
    // Predicated region
    $region18: #{tpu_custom_call.1} parent=1 // pred_check
      _
    $region19: #{tpu_custom_call.1} parent=1 // pred_check_branch
      %39 = sbr.rel (0) target = $region21
    $region20: #{tpu_custom_call.1} parent=1 // pred_region
      %40 = dma.done [#allocation6], 256
    $region21: #{tpu_custom_call.1} parent=1 // pred_fallthru
      _
    %v41 = vld [vmem:[#allocation2] sm:$0xff]
    %v42 = vld [vmem:[#allocation5] sm:$0xff]
    %v43 = vld [vmem:[#allocation5 + $0x8] sm:$0xff]
    %v44 = vld [vmem:[%s2] sm:$0x1]
    %v46 = vlaneseq
    %v47 = vshrl.u32 %v46, 7
    %v48 = vsub.s32 0, %v47
    %v49 = vrot.slane %v44, %v48
    %vm51 = vcmask 130048
    %v53 = vsel %vm51, %v41, 0
    %55 = vmatprep.subr.mxu0 0.0
    %56 = vmatpush1.msra.mxu0 %v42
    %57 = vmatprep.subr.mxu0 0.0
    %58 = vmatpush1.msra.mxu0 %v43
    %59 = vmatprep.subr.mxu0 0.0
    %60 = vmatpush1.msra.mxu0 0.0
    %61 = vmatprep.subr.mxu0 0.0
    %62 = vmatpush1.msra.mxu0 0.0
    %63 = vmatprep.subr.mxu0 0.0
    %64 = vmatpush1.msra.mxu0 0.0
    %65 = vmatprep.subr.mxu0 0.0
    %66 = vmatpush1.msra.mxu0 0.0
    %67 = vmatprep.subr.mxu0 0.0
    %68 = vmatpush1.msra.mxu0 0.0
    %69 = vmatprep.subr.mxu0 0.0
    %70 = vmatpush1.msra.mxu0 0.0
    %71 = vmatprep.subr.mxu0 0.0
    %72 = vmatpush1.msra.mxu0 0.0
    %73 = vmatprep.subr.mxu0 0.0
    %74 = vmatpush1.msra.mxu0 0.0
    %75 = vmatprep.subr.mxu0 0.0
    %76 = vmatpush1.msra.mxu0 0.0
    %77 = vmatprep.subr.mxu0 0.0
    %78 = vmatpush1.msra.mxu0 0.0
    %79 = vmatprep.subr.mxu0 0.0
    %80 = vmatpush1.msra.mxu0 0.0
    %81 = vmatprep.subr.mxu0 0.0
    %82 = vmatpush1.msra.mxu0 0.0
    %83 = vmatprep.subr.mxu0 0.0
    %84 = vmatpush1.msra.mxu0 0.0
    %85 = vmatprep.subr.mxu0 0.0
    %86 = vmatpush1.msra.mxu0 0.0
    %87 = vmatprep.subr.mxu0 0.0
    %88 = vmatpush1.msra.mxu0 0.0
    %89 = vmatprep.subr.mxu0 0.0
    %90 = vmatpush1.msra.mxu0 0.0
    %91 = vmatprep.subr.mxu0 0.0
    %92 = vmatpush1.msra.mxu0 0.0
    %93 = vmatprep.subr.mxu0 0.0
    %94 = vmatpush1.msra.mxu0 0.0
    %95 = vmatprep.subr.mxu0 0.0
    %96 = vmatpush1.msra.mxu0 0.0
    %97 = vmatprep.subr.mxu0 0.0
    %98 = vmatpush1.msra.mxu0 0.0
    %99 = vmatprep.subr.mxu0 0.0
    %100 = vmatpush1.msra.mxu0 0.0
    %101 = vmatprep.subr.mxu0 0.0
    %102 = vmatpush1.msra.mxu0 0.0
    %103 = vmatprep.subr.mxu0 0.0
    %104 = vmatpush1.msra.mxu0 0.0
    %105 = vmatprep.subr.mxu0 0.0
    %106 = vmatpush1.msra.mxu0 0.0
    %107 = vmatprep.subr.mxu0 0.0
    %108 = vmatpush1.msra.mxu0 0.0
    %109 = vmatprep.subr.mxu0 0.0
    %110 = vmatpush1.msra.mxu0 0.0
    %111 = vmatprep.subr.mxu0 0.0
    %112 = vmatpush1.msra.mxu0 0.0
    %113 = vmatprep.subr.mxu0 0.0
    %114 = vmatpush1.msra.mxu0 0.0
    %115 = vmatprep.subr.mxu0 0.0
    %116 = vmatpush1.msra.mxu0 0.0
    %117 = vmatprep.subr.mxu0 0.0
    %118 = vmatpush1.msra.mxu0 0.0
    %119 = vmatprep.mubr.f32.mxu0 0.0
    %120 = vmatmul.mubr.f32.gmra.mrb[0].mxu0 %v53
    %v121 = vpop.f32.mrb[0].mxu0
    %v122 = vadd.f32 %v49, %v121
    %v123 = vpop.f32.mrb[0].mxu0
    %124 = vdwg.mxu0
    %v125 = vand.u32 2147483647, %v122
    %vm126 = vcmp.le.f32.partialorder %v125, 0.7853982
    %vm127 = vcmp.lt.s32.totalorder %v122, 0
    %v128 = vand.u32 %v122, 2139095040
    %v129 = vshrl.u32 %v128, 23
    %v130 = vsub.s32 %v129, 127
    %v131 = vand.u32 2147483647, %v122
    %v132 = vand.u32 %v131, 8388607
    %v133 = vor.u32 %v132, 8388608
    %v134 = vsub.s32 0, %v133
    %v135 = vadd.s32 %v130, 1
    %vm136 = vcmp.gt.s32.totalorder %v135, 0
    %v137 = vsel %vm136, %v135, 0
    %v138 = vshrl.u32 %v137, 5
    %v139 = vand.u32 %v137, 31
    %v140 = vsub.s32 32, %v139
    %v141 = vshrl.u32 683565275, %v140
    %v142 = vshll.u32 683565275, %v139
    %v143 = vshrl.u32 2475754826, %v140
    %v144 = vor.u32 %v142, %v143
    %v145 = vshll.u32 2475754826, %v139
    %v146 = vshrl.u32 2131351028, %v140
    %v147 = vor.u32 %v145, %v146
    %v148 = vshll.u32 2131351028, %v139
    %v149 = vshrl.u32 2102212464, %v140
    %v150 = vor.u32 %v148, %v149
    %v151 = vshll.u32 2102212464, %v139
    %v152 = vshrl.u32 920167782, %v140
    %v153 = vor.u32 %v151, %v152
    %v154 = vshll.u32 920167782, %v139
    %v155 = vshrl.u32 1326507024, %v140
    %v156 = vor.u32 %v154, %v155
    %vm157 = vcmp.lt.s32.totalorder %v138, 1
    %vm158 = vcmp.lt.s32.totalorder %v138, 2
    %vm159 = vcmp.lt.s32.totalorder %v138, 3
    %vm160 = vcmp.lt.s32.totalorder %v138, 4
    %v161 = vsel %vm157, %v141, %v144
    %v162 = vsel %vm160, %v150, 2102212464
    %v163 = vsel %vm159, %v147, %v162
    %v164 = vsel %vm158, %v161, %v163
    %v165 = vsel %vm157, %v144, %v147
    %v166 = vsel %vm160, %v153, 920167782
    %v167 = vsel %vm159, %v150, %v166
    %v168 = vsel %vm158, %v165, %v167
    %v169 = vsel %vm157, %v147, %v150
    %v170 = vsel %vm160, %v156, 1326507024
    %v171 = vsel %vm159, %v153, %v170
    %v172 = vsel %vm158, %v169, %v171
    %v173 = vshll.u32 %v133, 8
    %v174 = vmul.u32.u64.compose %v173, %v172
    %v175 = vextract.low.u32 %v174
    %v176 = vextract.high.u32 %v174
    %v177 = vmul.u32.u64.compose %v173, %v168
    %v178 = vextract.low.u32 %v177
    %v179 = vextract.high.u32 %v177
    %v180 = vmul.u32 %v173, %v164
    %v181 = vadd.s32 %v176, %v178
    %vm182 = vc.u32 %v176, %v178
    %v183 = vadd.s32 %v179, 1
    %v184 = vsel %vm182, %v183, %v179
    %v185 = vadd.s32 %v180, %v184
    %v186 = vadd.s32 %v185, 536870912
    %v187 = vshrl.u32 %v186, 30
    %v188 = vshll.u32 %v187, 30
    %v189 = vsub.s32 %v185, %v188
    %vm190 = vcmp.lt.s32.totalorder %v189, 0
    %v191 = vsub.s32 0, %v189
    %v192 = vsel %vm190, %v191, %v189
    %v193 = vclz %v192
    %v194 = vsub.s32 %v193, 2
    %vm195 = vcmp.gt.s32.totalorder 0, %v194
    %v196 = vsel %vm195, 0, %v194
    %v197 = vsub.s32 32, %v196
    %v198 = vshll.u32 %v189, %v196
    %v199 = vshrl.u32 %v181, %v197
    %v200 = vor.u32 %v198, %v199
    %v201 = vsub.s32 4294967266, %v196
    %v202 = vadd.s32 %v201, 127
    %v203 = vshll.u32 %v202, 23
    %v204 = vor.u32 4788187, %v203
    %v205 = vand.u32 2147483647, %v204
    %v207 = vcvt.s32.f32 %v200
    %v208 = vmul.f32 %v207, %v205
    %v209 = vxor.u32 %v208, 2147483648
    %v210 = vsel %vm127, %v209, %v208
    %v211 = vsub.s32 4, %v187
    %v212 = vsel %vm127, %v211, %v187
    %v213 = vsel %vm126, %v122, %v210
    %v214 = vsel %vm126, 0, %v212
    %v215 = vcosq.f32.pop %v213
    %v216 = vsinq.f32.pop %v213
    %vm217 = vweird.f32 %v122
    %v218 = vadd.s32 %v214, 3
    %v219 = vand.u32 %v218, 3
    %vm220 = vcmp.lt.s32.totalorder %v219, 2
    %vm221 = vcmp.eq.s32.totalorder %v219, 0
    %v222 = vxor.u32 %v216, 2147483648
    %v223 = vsel %vm221, %v215, %v222
    %vm224 = vcmp.eq.s32.totalorder %v219, 2
    %v225 = vxor.u32 %v215, 2147483648
    %v226 = vsel %vm224, %v225, %v216
    %v227 = vsel %vm220, %v223, %v226
    %v228 = vsel %vm217, nan, %v227
    %229 = vst [vmem:[#allocation7] sm:$0xff] %v228
    // Predicated region
    $region22: #{tpu_custom_call.1} parent=1 // pred_check
      _
    $region23: #{tpu_custom_call.1} parent=1 // pred_check_branch
      %231 = sbr.rel (0) target = $region25
    $region24: #{tpu_custom_call.1} parent=1 // pred_region
      %s233 = ssub.s32 128, 128
      %234 = vsyncadd [#allocation4], %s233
      %s236 = sshll.u32 [#allocation7], 4
      %s237 = int_to_ptr.vmem [resolvable:$true] %s236
      %239 = dma.vmem_to_hbm [thread:$0]  %s237, 128, %s3, [#allocation4]
    $region25: #{tpu_custom_call.1} parent=1 // pred_fallthru
      _
    // Predicated region
    $region26: #{tpu_custom_call.1} parent=1 // pred_check
      _
    $region27: #{tpu_custom_call.1} parent=1 // pred_check_branch
      %241 = sbr.rel (0) target = $region29
    $region28: #{tpu_custom_call.1} parent=1 // pred_region
      %242 = dma.done [#allocation4], 128
    $region29: #{tpu_custom_call.1} parent=1 // pred_fallthru
      _
    %243 = vsyncpa [#allocation3], 1
    %244 = vsyncpa [#allocation6], 1
    %245 = vsyncpa [#allocation4], 1

</llo_original>
